<compile_context>
chip_gen: v6e
topology: v6e:2x2x1
jax: 0.10.0
libtpu: 0.0.40
codegen_flags: <defaults>
</compile_context>

<pallas_src>
import functools

import jax
import jax.numpy as jnp
from jax.experimental import pallas as pl
from jax.experimental.pallas import tpu as pltpu


def _round_up(x, m):
    return (x + m - 1) // m * m


def _cdc_kernel(x_ref, w_ref, o_ref, *, H, W, L_pad, C_in, B_tile):
    """One grid step = B_tile images.

    x_ref: (B_tile, C_in, L_pad)   raw (unpadded) images, spatial flattened on lanes
    w_ref: (C_out, 5*C_in)         folded X-kernel weights (tap-major along K)
    o_ref: (B_tile, C_out, L_pad)  conv output, spatial flattened on lanes
    """
    R = B_tile * C_in
    x = x_ref[...].reshape(R, L_pad)          # batch folded onto sublanes (free reshape)

    # Conv boundary handling via lane masks (replaces the old pre-padded HBM copy).
    lane = jax.lax.broadcasted_iota(jnp.int32, (1, L_pad), 1)
    col = lane % W
    up_ok = lane >= W                          # (h-1) in range
    down_ok = lane < (H - 1) * W               # (h+1) in range
    left_ok = col != 0                         # (w-1) in range
    right_ok = col != (W - 1)                  # (w+1) in range

    zero = jnp.zeros((), x.dtype)

    def tap(shift, mask):
        # XLU lane rotation (aligned, cheap) + VPU select instead of misaligned slices.
        r = pltpu.roll(x, shift, axis=1)
        return jnp.where(mask, r, zero)

    taps = [
        tap((W + 1) % L_pad, up_ok & left_ok),         # source (h-1, w-1)
        tap((W - 1) % L_pad, up_ok & right_ok),        # source (h-1, w+1)
        x,                                             # source (h, w): theta-folded centre tap
        tap((-(W - 1)) % L_pad, down_ok & left_ok),    # source (h+1, w-1)
        tap((-(W + 1)) % L_pad, down_ok & right_ok),   # source (h+1, w+1)
    ]

    # Lane-concatenate the per-image tap operands -> ONE wide MXU matmul per grid step.
    per_img = [
        jnp.concatenate([t[b * C_in:(b + 1) * C_in] for t in taps], axis=0)   # (5*C_in, L_pad)
        for b in range(B_tile)
    ]
    a = per_img[0] if B_tile == 1 else jnp.concatenate(per_img, axis=1)       # (5*C_in, B_tile*L_pad)

    res = jnp.dot(w_ref[...], a, preferred_element_type=jnp.float32)          # (C_out, B_tile*L_pad)
    for b in range(B_tile):                    # 128-aligned lane slices, unmasked stores
        o_ref[b] = res[:, b * L_pad:(b + 1) * L_pad].astype(o_ref.dtype)
    # TODO(synk): prototype a VPU broadcast-FMA variant (w scalars from SMEM) for v6e/v7x;
    # at C_in=4/C_out=8 the MXU is <4% filled and the contraction fits in the VALU slots.


def _choose_b_tile(n, per_img_bytes, fixed_bytes, budget_bytes):
    """Largest divisor of n that fits the VMEM budget while keeping >=2 grid steps."""
    b_budget = max(1, int((budget_bytes - fixed_bytes) // max(per_img_bytes, 1)))
    desired_steps = min(n, 4)                  # >=2 steps: both v7x cores busy + pipelining
    cap = max(1, min(b_budget, n // desired_steps))
    for d in range(cap, 0, -1):
        if n % d == 0:
            return d
    return 1


def conv2d_diag_cross(x_nchw, weight, theta=0.7, *, compute_dtype=None):
    """Forward pass of Conv2d_Diag_Cross.

    x_nchw: (N, C_in, H, W), weight: (C_out, C_in, 1, 5).
    compute_dtype: None -> use input dtype; jnp.bfloat16 recommended on v6e/v7x
    (accumulation stays f32, output dtype stays the input dtype).
    """
    N, C_in, H, W = x_nchw.shape
    C_out = weight.shape[0]
    assert weight.shape == (C_out, C_in, 1, 5)

    out_dtype = x_nchw.dtype
    cdtype = jnp.dtype(compute_dtype) if compute_dtype is not None else jnp.dtype(out_dtype)

    L = H * W
    L_pad = _round_up(L, 128)

    # --- input glue: contiguous reshape (free); lane pad / cast only if actually needed ---
    x_flat = x_nchw.reshape(N, C_in, L)
    if cdtype != x_flat.dtype:
        x_flat = x_flat.astype(cdtype)         # cast before any padding copy
    if L_pad != L:
        x_flat = jnp.pad(x_flat, ((0, 0), (0, 0), (0, L_pad - L)))

    # --- weights: fold theta * (1x1 sum kernel) into the centre tap; tap-major K ---
    w = weight[:, :, 0, :].astype(jnp.float32)                    # (C_out, C_in, 5)
    w_taps = [w[:, :, t] for t in range(5)]
    w_taps[2] = w_taps[2] - theta * w.sum(axis=-1)                # w2' = w2 - theta*sum(taps)
    w_mat = jnp.concatenate(w_taps, axis=1).astype(cdtype)        # (C_out, 5*C_in)

    # --- generation-aware VMEM budget (64 MiB/TC on v7x vs 128 MiB on v5e/v6e) ---
    try:
        vmem_cap = int(pltpu.get_tpu_info().vmem_capacity_bytes)
    except Exception:
        vmem_cap = 64 * 2 ** 20
    budget = vmem_cap * 3 // 4                                    # ~48 MiB v7x, ~96 MiB v5e/v6e

    cbytes = jnp.dtype(cdtype).itemsize
    obytes = jnp.dtype(out_dtype).itemsize
    per_img = (2 * C_in * L_pad * cbytes            # double-buffered input block
               + 2 * C_out * L_pad * obytes         # double-buffered output block
               + 2 * 5 * C_in * L_pad * cbytes      # rolled taps + wide matmul operand copies
               + C_out * L_pad * 4)                 # f32 matmul result
    fixed = 2 * C_out * 5 * C_in * cbytes + (2 << 20)
    b_tile = _choose_b_tile(N, per_img, fixed, budget)
    grid_n = N // b_tile
    vmem_limit = int(budget)

    kernel = functools.partial(_cdc_kernel, H=H, W=W, L_pad=L_pad, C_in=C_in, B_tile=b_tile)
    out_flat = pl.pallas_call(
        kernel,
        out_shape=jax.ShapeDtypeStruct((N, C_out, L_pad), out_dtype),
        grid_spec=pltpu.PrefetchScalarGridSpec(
            num_scalar_prefetch=0,
            grid=(grid_n,),
            in_specs=[
                pl.BlockSpec((b_tile, C_in, L_pad), lambda n: (n, 0, 0)),
                pl.BlockSpec((C_out, 5 * C_in), lambda n: (0, 0)),
            ],
            out_specs=pl.BlockSpec((b_tile, C_out, L_pad), lambda n: (n, 0, 0)),
        ),
        compiler_params=pltpu.CompilerParams(
            dimension_semantics=("parallel",),
            vmem_limit_bytes=vmem_limit,
        ),
    )(x_flat, w_mat)

    if L_pad != L:                              # only needed when H*W is not a 128 multiple
        out_flat = out_flat[:, :, :L]
    return out_flat.reshape(N, C_out, H, W)     # contiguous reshape: no epilogue copy


def _reference(x, weight, theta):
    """Pure-JAX reference mirroring the PyTorch forward exactly."""
    C_out, C_in, _, _ = weight.shape
    zeros = jnp.zeros((C_out, C_in, 1), x.dtype)
    w = weight[:, :, 0, :]
    k = jnp.concatenate(
        [w[:, :, 0:1], zeros, w[:, :, 1:2], zeros, w[:, :, 2:3],
         zeros, w[:, :, 3:4], zeros, w[:, :, 4:5]], axis=2
    ).reshape(C_out, C_in, 3, 3)
    out_normal = jax.lax.conv_general_dilated(
        x, k, window_strides=(1, 1), padding=((1, 1), (1, 1)),
        dimension_numbers=("NCHW", "OIHW", "NCHW"))
    kdiff = weight.sum(axis=(2, 3))[:, :, None, None]
    out_diff = jax.lax.conv_general_dilated(
        x, kdiff, window_strides=(1, 1), padding=((0, 0), (0, 0)),
        dimension_numbers=("NCHW", "OIHW", "NCHW"))
    return out_normal - theta * out_diff


if __name__ == "__main__":
    key = jax.random.PRNGKey(0)
    kx, kw = jax.random.split(key)

    N, C_in, H, W = 2, 4, 16, 16
    C_out = 8
    theta = 0.7

    x = jax.random.normal(kx, (N, C_in, H, W), dtype=jnp.float32)
    # Deterministic synthetic weights for nn.Conv2d(C_in, C_out, kernel_size=(1,5), bias=False)
    weight = jax.random.normal(kw, (C_out, C_in, 1, 5), dtype=jnp.float32) * 0.1

    ref = _reference(x, weight, theta)

    # f32 compute path: strict correctness check.
    out = jax.block_until_ready(conv2d_diag_cross(x, weight, theta))
    assert out.shape == (N, C_out, H, W)
    assert jnp.allclose(out, ref, rtol=1e-4, atol=1e-4)

    # bf16 MXU path (f32 accumulation) recommended for v6e/v7x: halves HBM bytes.
    out_bf16 = jax.block_until_ready(
        conv2d_diag_cross(x, weight, theta, compute_dtype=jnp.bfloat16))
    assert out_bf16.shape == (N, C_out, H, W)
    assert jnp.allclose(out_bf16, ref, rtol=5e-2, atol=5e-2)

    print("KERNEL_OK")
</pallas_src>

<mosaic_0001>
module attributes {stable_mosaic.version = 11 : i64} {
  func.func @_cdc_kernel(%arg0: i32, %arg1: memref<1x4x256xf32, #tpu.memory_space<vmem>>, %arg2: memref<8x20xf32, #tpu.memory_space<vmem>>, %arg3: memref<1x8x256xf32, #tpu.memory_space<vmem>>) attributes {dimension_semantics = [#tpu.dimension_semantics<parallel>], iteration_bounds = array<i64: 2>, scalar_prefetch = 0 : i64, scratch_operands = 0 : i64, tpu.core_type = #tpu.core_type<tc>, window_params = [{transform_indices = @transform_0, window_bounds = array<i64: 1, 4, 256>}, {pipeline_mode = #tpu.pipeline_mode<synchronous>, transform_indices = @transform_1, window_bounds = array<i64: 8, 20>}, {transform_indices = @transform_2, window_bounds = array<i64: 1, 8, 256>}]} {
    %c0 = arith.constant 0 : index
    %c0_0 = arith.constant 0 : index
    %c0_1 = arith.constant 0 : index
    %0 = vector.load %arg1[%c0, %c0_0, %c0_1] : memref<1x4x256xf32, #tpu.memory_space<vmem>>, vector<1x4x256xf32>
    %1 = vector.shape_cast %0 : vector<1x4x256xf32> to vector<4x256xf32>
    %2 = tpu.iota {dimensions = array<i32: 1>} : vector<1x256xi32>
    %c16_i32 = arith.constant 16 : i32
    %c0_i32 = arith.constant 0 : i32
    %3 = arith.cmpi eq, %c16_i32, %c0_i32 : i32
    %c1_i32 = arith.constant 1 : i32
    %4 = arith.select %3, %c1_i32, %c16_i32 : i32
    %5 = vector.broadcast %4 : i32 to vector<1x256xi32>
    %6 = arith.remsi %2, %5 : vector<1x256xi32>
    %c0_i32_2 = arith.constant 0 : i32
    %7 = vector.broadcast %c0_i32_2 : i32 to vector<1x256xi32>
    %8 = arith.cmpi ne, %6, %7 : vector<1x256xi32>
    %c0_i32_3 = arith.constant 0 : i32
    %9 = vector.broadcast %c0_i32_3 : i32 to vector<1x256xi32>
    %10 = arith.cmpi slt, %6, %9 : vector<1x256xi32>
    %c0_i32_4 = arith.constant 0 : i32
    %11 = arith.cmpi slt, %4, %c0_i32_4 : i32
    %12 = vector.broadcast %11 : i1 to vector<1x256xi1>
    %13 = vector.broadcast %12 : vector<1x256xi1> to vector<1x256xi1>
    %14 = arith.xori %10, %13 : vector<1x256xi1>
    %15 = arith.andi %14, %8 : vector<1x256xi1>
    %16 = vector.broadcast %4 : i32 to vector<1x256xi32>
    %17 = arith.addi %6, %16 : vector<1x256xi32>
    %18 = arith.select %15, %17, %6 : vector<1x256xi1>, vector<1x256xi32>
    %c16_i32_5 = arith.constant 16 : i32
    %19 = vector.broadcast %c16_i32_5 : i32 to vector<1x256xi32>
    %20 = arith.cmpi sge, %2, %19 : vector<1x256xi32>
    %c240_i32 = arith.constant 240 : i32
    %21 = vector.broadcast %c240_i32 : i32 to vector<1x256xi32>
    %22 = arith.cmpi slt, %2, %21 : vector<1x256xi32>
    %c0_i32_6 = arith.constant 0 : i32
    %23 = vector.broadcast %c0_i32_6 : i32 to vector<1x256xi32>
    %24 = arith.cmpi ne, %18, %23 : vector<1x256xi32>
    %c15_i32 = arith.constant 15 : i32
    %25 = vector.broadcast %c15_i32 : i32 to vector<1x256xi32>
    %26 = arith.cmpi ne, %18, %25 : vector<1x256xi32>
    %27 = arith.andi %20, %24 : vector<1x256xi1>
    %c17_i32 = arith.constant 17 : i32
    %28 = tpu.dynamic_rotate %1 by %c17_i32 dim 1 : vector<4x256xf32>, i32 -> vector<4x256xf32>
    %cst = arith.constant 0.000000e+00 : f32
    %29 = vector.shape_cast %27 : vector<1x256xi1> to vector<1x256xi1>
    %30 = vector.broadcast %29 : vector<1x256xi1> to vector<4x256xi1>
    %31 = vector.broadcast %cst : f32 to vector<4x256xf32>
    %32 = arith.select %30, %28, %31 : vector<4x256xi1>, vector<4x256xf32>
    %33 = arith.andi %20, %26 : vector<1x256xi1>
    %c15_i32_7 = arith.constant 15 : i32
    %34 = tpu.dynamic_rotate %1 by %c15_i32_7 dim 1 : vector<4x256xf32>, i32 -> vector<4x256xf32>
    %cst_8 = arith.constant 0.000000e+00 : f32
    %35 = vector.shape_cast %33 : vector<1x256xi1> to vector<1x256xi1>
    %36 = vector.broadcast %35 : vector<1x256xi1> to vector<4x256xi1>
    %37 = vector.broadcast %cst_8 : f32 to vector<4x256xf32>
    %38 = arith.select %36, %34, %37 : vector<4x256xi1>, vector<4x256xf32>
    %39 = arith.andi %22, %24 : vector<1x256xi1>
    %c241_i32 = arith.constant 241 : i32
    %40 = tpu.dynamic_rotate %1 by %c241_i32 dim 1 : vector<4x256xf32>, i32 -> vector<4x256xf32>
    %cst_9 = arith.constant 0.000000e+00 : f32
    %41 = vector.shape_cast %39 : vector<1x256xi1> to vector<1x256xi1>
    %42 = vector.broadcast %41 : vector<1x256xi1> to vector<4x256xi1>
    %43 = vector.broadcast %cst_9 : f32 to vector<4x256xf32>
    %44 = arith.select %42, %40, %43 : vector<4x256xi1>, vector<4x256xf32>
    %45 = arith.andi %22, %26 : vector<1x256xi1>
    %c239_i32 = arith.constant 239 : i32
    %46 = tpu.dynamic_rotate %1 by %c239_i32 dim 1 : vector<4x256xf32>, i32 -> vector<4x256xf32>
    %cst_10 = arith.constant 0.000000e+00 : f32
    %47 = vector.shape_cast %45 : vector<1x256xi1> to vector<1x256xi1>
    %48 = vector.broadcast %47 : vector<1x256xi1> to vector<4x256xi1>
    %49 = vector.broadcast %cst_10 : f32 to vector<4x256xf32>
    %50 = arith.select %48, %46, %49 : vector<4x256xi1>, vector<4x256xf32>
    %51 = tpu.concatenate %32, %38, %1, %44, %50 in 0 : vector<4x256xf32>, vector<4x256xf32>, vector<4x256xf32>, vector<4x256xf32>, vector<4x256xf32> -> vector<20x256xf32>
    %c0_11 = arith.constant 0 : index
    %c0_12 = arith.constant 0 : index
    %52 = vector.load %arg2[%c0_11, %c0_12] : memref<8x20xf32, #tpu.memory_space<vmem>>, vector<8x20xf32>
    %cst_13 = arith.constant dense<0.000000e+00> : vector<8x256xf32>
    %53 = tpu.matmul %52, %51, %cst_13 {dimension_numbers = #tpu.dot_dimension_numbers<[1], [0], [0], [1], [0, 0, 1, 1], [], []>} : vector<8x20xf32>, vector<20x256xf32>, vector<8x256xf32> -> vector<8x256xf32>
    %c0_14 = arith.constant 0 : index
    %c0_15 = arith.constant 0 : index
    %c0_16 = arith.constant 0 : index
    %54 = vector.load %arg3[%c0_14, %c0_15, %c0_16] : memref<1x8x256xf32, #tpu.memory_space<vmem>>, vector<1x8x256xf32>
    %55 = vector.shape_cast %54 : vector<1x8x256xf32> to vector<8x256xf32>
    %56 = vector.shape_cast %53 : vector<8x256xf32> to vector<1x8x256xf32>
    tpu.vector_store %arg3[%c0_14, %c0_15, %c0_16], %56 {strides = array<i32>} : memref<1x8x256xf32, #tpu.memory_space<vmem>>, vector<1x8x256xf32>,
    return
  }
  func.func @transform_0(%arg0: i32) -> (i32, i32, i32) {
    %c0_i32 = arith.constant 0 : i32
    %c0_i32_0 = arith.constant 0 : i32
    %c0_i32_1 = arith.constant 0 : i32
    return %arg0, %c0_i32, %c0_i32_0 : i32, i32, i32
  }
  func.func @transform_1(%arg0: i32) -> (i32, i32) {
    %c0_i32 = arith.constant 0 : i32
    %c0_i32_0 = arith.constant 0 : i32
    %c0_i32_1 = arith.constant 0 : i32
    return %c0_i32, %c0_i32_0 : i32, i32
  }
  func.func @transform_2(%arg0: i32) -> (i32, i32, i32) {
    %c0_i32 = arith.constant 0 : i32
    %c0_i32_0 = arith.constant 0 : i32
    %c0_i32_1 = arith.constant 0 : i32
    return %arg0, %c0_i32, %c0_i32_0 : i32, i32, i32
  }
}

</mosaic_0001>

<llo_original>
// kernel: tpu_custom_call.1
$region0: #{tpu_custom_call.1}
  #allocation0 [shape = 'u32[]', space=smem, size = 0x4, offset = 0x4, fixed_abs, tag = 'smem constant byte address 0x4 - core index']
  #allocation1 [shape = 'u32[144,128]{1,0:T(1,128)}', space=vmem, size = 0x12000, scoped, tag = 'internal scratch']
  %s0 = inlined_call_operand.hbm [shape: f32[2,4,256], index: 0, kind: input, shape index: {}]
  %s1 = inlined_call_operand.hbm [shape: f32[8,20], index: 1, kind: input, shape index: {}]
  %s2 = inlined_call_operand.hbm [shape: f32[2,8,256], index: 2, kind: output, shape index: {}]
  %s3 = sld [smem:[#allocation0]]
  $region49: #{tpu_custom_call.1} parent=0
    _
  %s5 = ssub.s32 1, %s3
  %s6 = scalar_select 0, %s5, %s3
  $region1: #{tpu_custom_call.1} parent=0
    #allocation2 [shape = 'u8[8192]{0}', space=vmem, size = 0x2000, scoped, tag = 'input window, operand 0']
    #allocation3 [shape = 's32[2]{0}', space=sflag, size = 0x8, scoped, tag = 'scoped memory for tpu_custom_call.1']
    #allocation4 [shape = 's32[2]{0}', space=sflag, size = 0x8, scoped, tag = 'scoped memory for tpu_custom_call.1']
    #allocation5 [shape = 'u8[4096]{0}', space=vmem, size = 0x1000, scoped, tag = 'input window, operand 1, single buffered']
    #allocation6 [shape = 's32[1]{0}', space=sflag, size = 0x4, scoped, tag = 'scoped memory for tpu_custom_call.1']
    #allocation7 [shape = 'u8[16384]{0}', space=vmem, size = 0x4000, scoped, tag = 'output window, operand 0']
    %7 = vsyncpa [#allocation3], 0
    %s8 = scalar_lea.sflag [#allocation3], 1
    %9 = vsyncpa %s8, 0
    %10 = vsyncpa [#allocation6], 0
    %11 = vsyncpa [#allocation4], 0
    %s12 = scalar_lea.sflag [#allocation4], 1
    %13 = vsyncpa %s12, 0
    loop: start=0, step=1, limit=4
    $region2: #{tpu_custom_call.1} parent=1 // loop_pre_header
      _
    $region3: #{tpu_custom_call.1} parent=1 // loop_header
      %s15 = sphi 0, %s19
      %p16 = scmp.ge.s32.totalorder %s15, 4
      %s25 = sphi 0, %s27
      %s28 = sphi 0, %s25
      %s29 = sphi 0, %s28
      %s45 = sphi 0, %s29
      %s49 = sphi 0, %s49
      %s51 = sphi 0, %s49
      %s52 = sphi 0, %s51
      %s66 = sphi 0, %s52
      %s72 = sphi 0, %s74
      %s75 = sphi 0, %s72
      %s76 = sphi 0, %s75
      %s92 = sphi 0, %s76
    $region4: #{tpu_custom_call.1} parent=1 // loop_header_branch
      %18 = sbr.rel (%p16) target = $region8
    $region5: #{tpu_custom_call.1} parent=1 // loop_body
      %s20 = ssub.s32 %s15, 1
      %s21 = ssub.s32 %s15, 2
      %s22 = sadd.s32 %s15, 1
      %s23 = ssub.s32 %s15, %s22
      %p24 = scmp.eq.s32.totalorder %s23, 0
      %s26 = sadd.s32 %s25, 1
      %s27 = scalar_select %p24, %s25, %s26
      %p30 = pneg %p24
      %p31 = scmp.eq.s32.totalorder %s15, 1
      %p32 = por %p30, %p31
      %p33 = scmp.ne.s32.totalorder %s25, %s28
      %p34 = scmp.eq.s32.totalorder %s15, 0
      %p35 = por %p33, %p34
      %p36 = scmp.ne.s32.totalorder %s25, %s28
      %p37 = scmp.eq.s32.totalorder %s20, 1
      %p38 = por %p36, %p37
      %p39 = scmp.ne.s32.totalorder %s28, %s29
      %p40 = scmp.eq.s32.totalorder %s20, 0
      %p41 = por %p39, %p40
      %p42 = scmp.ne.s32.totalorder %s28, %s29
      %p43 = scmp.eq.s32.totalorder %s21, 1
      %p44 = por %p42, %p43
      %p46 = scmp.ne.s32.totalorder %s29, %s45
      %p47 = scmp.eq.s32.totalorder %s21, 0
      %p48 = por %p46, %p47
      %s50 = sadd.s32 %s49, 1
      %p53 = scmp.eq.s32.totalorder %s15, 1
      %p54 = scmp.ne.s32.totalorder %s49, %s51
      %p55 = scmp.eq.s32.totalorder %s15, 0
      %p56 = por %p54, %p55
      %p57 = scmp.ne.s32.totalorder %s49, %s51
      %p58 = scmp.eq.s32.totalorder %s20, 1
      %p59 = por %p57, %p58
      %p60 = scmp.ne.s32.totalorder %s51, %s52
      %p61 = scmp.eq.s32.totalorder %s20, 0
      %p62 = por %p60, %p61
      %p63 = scmp.ne.s32.totalorder %s51, %s52
      %p64 = scmp.eq.s32.totalorder %s21, 1
      %p65 = por %p63, %p64
      %p67 = scmp.ne.s32.totalorder %s52, %s66
      %p68 = scmp.eq.s32.totalorder %s21, 0
      %p69 = por %p67, %p68
      %s70 = ssub.s32 %s15, %s22
      %p71 = scmp.eq.s32.totalorder %s70, 0
      %s73 = sadd.s32 %s72, 1
      %s74 = scalar_select %p71, %s72, %s73
      %p77 = pneg %p71
      %p78 = scmp.eq.s32.totalorder %s15, 1
      %p79 = por %p77, %p78
      %p80 = scmp.ne.s32.totalorder %s72, %s75
      %p81 = scmp.eq.s32.totalorder %s15, 0
      %p82 = por %p80, %p81
      %p83 = scmp.ne.s32.totalorder %s72, %s75
      %p84 = scmp.eq.s32.totalorder %s20, 1
      %p85 = por %p83, %p84
      %p86 = scmp.ne.s32.totalorder %s75, %s76
      %p87 = scmp.eq.s32.totalorder %s20, 0
      %p88 = por %p86, %p87
      %p89 = scmp.ne.s32.totalorder %s75, %s76
      %p90 = scmp.eq.s32.totalorder %s21, 1
      %p91 = por %p89, %p90
      %p93 = scmp.ne.s32.totalorder %s76, %s92
      %p94 = scmp.eq.s32.totalorder %s21, 0
      %p95 = por %p93, %p94
      %p96 = scmp.le.s32.totalorder 1, %s15
      %p97 = scmp.lt.s32.totalorder %s15, 3
      %p98 = pnand %p96, %p97
      %p99 = pneg %p98
      // Predicated region
      $region9: #{tpu_custom_call.1} parent=5 // pred_check
        _
      $region10: #{tpu_custom_call.1} parent=5 // pred_check_branch
        %101 = sbr.rel (%p98) target = $region12
      $region11: #{tpu_custom_call.1} parent=5 // pred_region
        %s102 = ssub.s32 %s15, 1
        // Predicated region
        $region13: #{tpu_custom_call.1} parent=11 // pred_check
          %p103 = pneg %p62
        $region14: #{tpu_custom_call.1} parent=11 // pred_check_branch
          %105 = sbr.rel (%p103) target = $region16
        $region15: #{tpu_custom_call.1} parent=11 // pred_region
          %s107 = ssub.s32 128, 128
          %108 = vsyncadd [#allocation6], %s107
          %s110 = sshll.u32 [#allocation5], 4
          %s111 = int_to_ptr.vmem [resolvable:$true] %s110
          %113 = dma.hbm_to_vmem [thread:$0]  %s1, 128, %s111, [#allocation6]
        $region16: #{tpu_custom_call.1} parent=11 // pred_fallthru
          _
      $region12: #{tpu_custom_call.1} parent=5 // pred_fallthru
        _
      %p114 = scmp.lt.s32.totalorder %s15, 2
      // Predicated region
      $region17: #{tpu_custom_call.1} parent=5 // pred_check
        %p115 = pneg %p114
      $region18: #{tpu_custom_call.1} parent=5 // pred_check_branch
        %117 = sbr.rel (%p115) target = $region20
      $region19: #{tpu_custom_call.1} parent=5 // pred_region
        // Predicated region
        $region21: #{tpu_custom_call.1} parent=19 // pred_check
          %p118 = pneg %p35
        $region22: #{tpu_custom_call.1} parent=19 // pred_check_branch
          %120 = sbr.rel (%p118) target = $region24
        $region23: #{tpu_custom_call.1} parent=19 // pred_region
          %s121 = sand.u32 %s25, 1
          %s122 = scalar_lea.sflag [#allocation3], %s121
          %s123 = sand.u32 %s25, 1
          %s124 = smul.addr %s123, 8
          %s125 = scalar_lea.vmem [#allocation2], %s124
          %s127 = ssub.s32 128, 128
          %128 = vsyncadd %s122, %s127
          %s129 = smul.addr %s15, 2
          %s130 = smul.addr %s129, 64
          %s131 = scalar_lea.hbm %s0, %s130
          %s133 = sshll.u32 %s125, 4
          %s134 = int_to_ptr.vmem [resolvable:$true] %s133
          %136 = dma.hbm_to_vmem [thread:$0]  %s131, 128, %s134, %s122
        $region24: #{tpu_custom_call.1} parent=19 // pred_fallthru
          _
      $region20: #{tpu_custom_call.1} parent=5 // pred_fallthru
        _
      %p137 = scmp.le.s32.totalorder 1, %s15
      %p138 = scmp.lt.s32.totalorder %s15, 3
      %p139 = pnand %p137, %p138
      %p140 = pneg %p139
      // Predicated region
      $region25: #{tpu_custom_call.1} parent=5 // pred_check
        _
      $region26: #{tpu_custom_call.1} parent=5 // pred_check_branch
        %142 = sbr.rel (%p139) target = $region28
      $region27: #{tpu_custom_call.1} parent=5 // pred_region
        %s143 = ssub.s32 %s15, 1
        %s144 = sand.u32 %s28, 1
        %s145 = scalar_lea.sflag [#allocation3], %s144
        %s146 = sand.u32 %s28, 1
        %s147 = smul.addr %s146, 8
        %s148 = scalar_lea.vmem [#allocation2], %s147
        // Predicated region
        $region29: #{tpu_custom_call.1} parent=27 // pred_check
          %p149 = pneg %p41
        $region30: #{tpu_custom_call.1} parent=27 // pred_check_branch
          %151 = sbr.rel (%p149) target = $region32
        $region31: #{tpu_custom_call.1} parent=27 // pred_region
          %152 = dma.done %s145, 128
        $region32: #{tpu_custom_call.1} parent=27 // pred_fallthru
          _
        // Predicated region
        $region33: #{tpu_custom_call.1} parent=27 // pred_check
          %p153 = pneg %p62
        $region34: #{tpu_custom_call.1} parent=27 // pred_check_branch
          %155 = sbr.rel (%p153) target = $region36
        $region35: #{tpu_custom_call.1} parent=27 // pred_region
          %156 = dma.done [#allocation6], 128
        $region36: #{tpu_custom_call.1} parent=27 // pred_fallthru
          _
        %s157 = sand.u32 %s28, 1
        %s158 = scalar_lea.sflag [#allocation3], %s157
        %s159 = sand.u32 %s28, 1
        %s160 = smul.addr %s159, 8
        %s161 = scalar_lea.vmem [#allocation2], %s160
        %p162 = pneg %p41
        %p163 = pneg %p38
        %p164 = pneg %p62
        %p165 = pneg %p59
        %p166 = pneg %p88
        %p167 = pneg %p85
        %s168 = sand.u32 %s75, 1
        %s169 = scalar_lea.sflag [#allocation4], %s168
        %s170 = sand.u32 %s75, 1
        %s171 = smul.addr %s170, 16
        %s172 = scalar_lea.vmem [#allocation7], %s171
        %v173 = vld [vmem:[%s148] sm:$0xff]
        %v174 = vlaneseq
        %v175 = vand.u32 %v174, 127
        %v176 = vadd.s32 %v175, 128
        %vm177 = vcmp.lt.s32.totalorder %v175, 0
        %v178 = vsub.s32 0, %v175
        %v179 = vsel %vm177, %v178, %v175
        %v180 = vshrl.u32 %v179, 4
        %v181 = vand.u32 %v179, 15
        %v182 = vsub.s32 0, %v181
        %v183 = vsel %vm177, %v182, %v181
        %vm184 = vcmp.lt.s32.totalorder %v176, 0
        %v185 = vsub.s32 0, %v176
        %v186 = vsel %vm184, %v185, %v176
        %v187 = vshrl.u32 %v186, 4
        %v188 = vand.u32 %v186, 15
        %v189 = vsub.s32 0, %v188
        %v190 = vsel %vm184, %v189, %v188
        %vm191 = vcmp.ne.s32.totalorder %v183, 0
        %vm192 = vcmp.ne.s32.totalorder %v190, 0
        %vm193 = vcmp.lt.s32.totalorder %v183, 0
        %vm194 = vcmp.lt.s32.totalorder %v190, 0
        %vm195 = vmand %vm193, %vm191
        %vm196 = vmand %vm194, %vm192
        %v197 = vadd.s32 %v183, 16
        %v198 = vadd.s32 %v190, 16
        %v199 = vsel %vm195, %v197, %v183
        %v200 = vsel %vm196, %v198, %v190
        %vm201 = vcmp.ge.s32.totalorder %v175, 16
        %vm202 = vcmp.ge.s32.totalorder %v176, 16
        %vm203 = vcmp.lt.s32.totalorder %v175, 240
        %vm204 = vcmp.lt.s32.totalorder %v176, 240
        %vm205 = vcmp.ne.s32.totalorder %v199, 0
        %vm206 = vcmp.ne.s32.totalorder %v200, 0
        %vm207 = vcmp.ne.s32.totalorder %v199, 15
        %vm208 = vcmp.ne.s32.totalorder %v200, 15
        %vm209 = vmand %vm201, %vm205
        %vm210 = vmand %vm202, %vm206
        %v212 = vcombine.high %v173, %v173
        %214 = vrot.lane.b32.xlu0 %v173, 17
        %v215 = vpop.permute.xlu0 %214
        %216 = vrot.lane.b32.xlu0 %v212, 17
        %v217 = vpop.permute.xlu0 %216
        %vm218 = vcmp.lt.s32.totalorder %v175, 17
        %v219 = vsel %vm218, %v215, %v217
        %v220 = vsel %vm218, %v217, %v215
        %v221 = vsel %vm209, 1, 0
        %v222 = vsel %vm210, 1, 0
        %vm223 = vcmp.eq.s32.totalorder %v221, 1
        %vm224 = vcmp.eq.s32.totalorder %v222, 1
        %v225 = vsel %vm223, %v220, 0.0
        %v226 = vsel %vm224, %v219, 0.0
        %vm227 = vmand %vm201, %vm207
        %vm228 = vmand %vm202, %vm208
        %229 = vrot.lane.b32.xlu0 %v173, 15
        %v230 = vpop.permute.xlu0 %229
        %231 = vrot.lane.b32.xlu0 %v212, 15
        %v232 = vpop.permute.xlu0 %231
        %vm233 = vcmp.lt.s32.totalorder %v175, 15
        %v234 = vsel %vm233, %v230, %v232
        %v235 = vsel %vm233, %v232, %v230
        %v236 = vsel %vm227, 1, 0
        %v237 = vsel %vm228, 1, 0
        %vm238 = vcmp.eq.s32.totalorder %v236, 1
        %vm239 = vcmp.eq.s32.totalorder %v237, 1
        %v240 = vsel %vm238, %v235, 0.0
        %v241 = vsel %vm239, %v234, 0.0
        %vm242 = vmand %vm203, %vm205
        %vm243 = vmand %vm204, %vm206
        %244 = vrot.lane.b32.xlu0 %v173, 113
        %v245 = vpop.permute.xlu0 %244
        %246 = vrot.lane.b32.xlu0 %v212, 113
        %v247 = vpop.permute.xlu0 %246
        %vm248 = vcmp.lt.s32.totalorder %v175, 113
        %v249 = vsel %vm248, %v245, %v247
        %v250 = vsel %vm248, %v247, %v245
        %v251 = vsel %vm242, 1, 0
        %v252 = vsel %vm243, 1, 0
        %vm253 = vcmp.eq.s32.totalorder %v251, 1
        %vm254 = vcmp.eq.s32.totalorder %v252, 1
        %v255 = vsel %vm253, %v249, 0.0
        %v256 = vsel %vm254, %v250, 0.0
        %vm257 = vmand %vm203, %vm207
        %vm258 = vmand %vm204, %vm208
        %259 = vrot.lane.b32.xlu0 %v173, 111
        %v260 = vpop.permute.xlu0 %259
        %261 = vrot.lane.b32.xlu0 %v212, 111
        %v262 = vpop.permute.xlu0 %261
        %vm263 = vcmp.lt.s32.totalorder %v175, 111
        %v264 = vsel %vm263, %v260, %v262
        %v265 = vsel %vm263, %v262, %v260
        %v266 = vsel %vm257, 1, 0
        %v267 = vsel %vm258, 1, 0
        %vm268 = vcmp.eq.s32.totalorder %v266, 1
        %vm269 = vcmp.eq.s32.totalorder %v267, 1
        %v270 = vsel %vm268, %v264, 0.0
        %v271 = vsel %vm269, %v265, 0.0
        %v274 = vrot.slane %v240, 4
        %v275 = vrot.slane %v241, 4
        %v280 = vrot.slane %v255, 4
        %v281 = vrot.slane %v256, 4
        %vm284 = vcmask 1043456
        %v285 = vsel %vm284, %v225, %v274
        %v286 = vsel %vm284, %v226, %v275
        %v287 = vsel %vm284, %v173, %v280
        %v288 = vsel %vm284, %v212, %v281
        %v289 = vld [vmem:[#allocation5] sm:$0xff]
        %vm290 = vcmask 162816
        %v292 = vsel %vm290, %v289, 0
        %v295 = vsel %vm284, %v270, 0
        %v298 = vsel %vm284, %v271, 0
        %300 = vmatprep.subr.mxu0 0.0
        %301 = vmatpush1.msra.mxu0 0.0
        %302 = vmatprep.subr.mxu0 0.0
        %303 = vmatpush1.msra.mxu0 0.0
        %304 = vmatprep.subr.mxu0 0.0
        %305 = vmatpush1.msra.mxu0 0.0
        %306 = vmatprep.subr.mxu0 0.0
        %307 = vmatpush1.msra.mxu0 0.0
        %308 = vmatprep.subr.mxu0 0.0
        %309 = vmatpush1.msra.mxu0 0.0
        %310 = vmatprep.subr.mxu0 0.0
        %311 = vmatpush1.msra.mxu0 0.0
        %312 = vmatprep.subr.mxu0 0.0
        %313 = vmatpush1.msra.mxu0 0.0
        %314 = vmatprep.subr.mxu0 0.0
        %315 = vmatpush1.msra.mxu0 0.0
        %316 = vmatprep.subr.mxu0 0.0
        %317 = vmatpush1.msra.mxu0 0.0
        %318 = vmatprep.subr.mxu0 0.0
        %319 = vmatpush1.msra.mxu0 0.0
        %320 = vmatprep.subr.mxu0 0.0
        %321 = vmatpush1.msra.mxu0 0.0
        %322 = vmatprep.subr.mxu0 0.0
        %323 = vmatpush1.msra.mxu0 0.0
        %324 = vmatprep.subr.mxu0 0.0
        %325 = vmatpush1.msra.mxu0 0.0
        %326 = vmatprep.subr.mxu0 %v298
        %327 = vmatpush1.msra.mxu0 %v295
        %328 = vmatprep.subr.mxu0 %v288
        %329 = vmatpush1.msra.mxu0 %v287
        %330 = vmatprep.subr.mxu0 %v286
        %331 = vmatpush1.msra.mxu0 %v285
        %332 = vmatprep.subr.mxu0 0.0
        %333 = vmatpush2.msra.mxu0 0.0
        %334 = vmatprep.subr.mxu0 0.0
        %335 = vmatpush2.msra.mxu0 0.0
        %336 = vmatprep.subr.mxu0 0.0
        %337 = vmatpush2.msra.mxu0 0.0
        %338 = vmatprep.subr.mxu0 0.0
        %339 = vmatpush2.msra.mxu0 0.0
        %340 = vmatprep.subr.mxu0 0.0
        %341 = vmatpush2.msra.mxu0 0.0
        %342 = vmatprep.subr.mxu0 0.0
        %343 = vmatpush2.msra.mxu0 0.0
        %344 = vmatprep.subr.mxu0 0.0
        %345 = vmatpush2.msra.mxu0 0.0
        %346 = vmatprep.subr.mxu0 0.0
        %347 = vmatpush2.msra.mxu0 0.0
        %348 = vmatprep.subr.mxu0 0.0
        %349 = vmatpush2.msra.mxu0 0.0
        %350 = vmatprep.subr.mxu0 0.0
        %351 = vmatpush2.msra.mxu0 0.0
        %352 = vmatprep.subr.mxu0 0.0
        %353 = vmatpush2.msra.mxu0 0.0
        %354 = vmatprep.subr.mxu0 0.0
        %355 = vmatpush2.msra.mxu0 0.0
        %356 = vmatprep.subr.mxu0 0.0
        %357 = vmatpush2.msra.mxu0 0.0
        %358 = vmatprep.subr.mxu0 0.0
        %359 = vmatpush2.msra.mxu0 0.0
        %360 = vmatprep.subr.mxu0 0.0
        %361 = vmatpush2.msra.mxu0 0.0
        %362 = vmatprep.subr.mxu0 0.0
        %363 = vmatpush2.msra.mxu0 0.0
        %364 = vmatprep.mubr.f32.mxu0 0.0
        %365 = vmatmul.mubr.f32.gmra.mxu0 %v292
        %v366 = vpop.f32.mrf.mxu0
        %v367 = vadd.f32 0.0, %v366
        %v368 = vpop.f32.mrf.mxu0
        %v369 = vadd.f32 0.0, %v368
        %370 = vdwg.mxu0
        %371 = vst [vmem:[%s172] sm:$0xff] %v367
        %372 = vst [vmem:[%s172 + $0x8] sm:$0xff] %v369
        %s373 = sand.u32 %s75, 1
        %s374 = scalar_lea.sflag [#allocation4], %s373
        %s375 = sand.u32 %s75, 1
        %s376 = smul.addr %s375, 16
        %s377 = scalar_lea.vmem [#allocation7], %s376
        // Predicated region
        $region37: #{tpu_custom_call.1} parent=27 // pred_check
          %p378 = pneg %p85
        $region38: #{tpu_custom_call.1} parent=27 // pred_check_branch
          %380 = sbr.rel (%p378) target = $region40
        $region39: #{tpu_custom_call.1} parent=27 // pred_region
          %s382 = ssub.s32 256, 256
          %383 = vsyncadd %s374, %s382
          %s384 = smul.addr %s20, 2
          %s385 = smul.addr %s384, 128
          %s386 = scalar_lea.hbm %s2, %s385
          %s388 = sshll.u32 %s377, 4
          %s389 = int_to_ptr.vmem [resolvable:$true] %s388
          %391 = dma.vmem_to_hbm [thread:$0]  %s389, 256, %s386, %s374
        $region40: #{tpu_custom_call.1} parent=27 // pred_fallthru
          _
      $region28: #{tpu_custom_call.1} parent=5 // pred_fallthru
        _
      %p392 = scmp.le.s32.totalorder 2, %s15
      // Predicated region
      $region41: #{tpu_custom_call.1} parent=5 // pred_check
        %p393 = pneg %p392
      $region42: #{tpu_custom_call.1} parent=5 // pred_check_branch
        %395 = sbr.rel (%p393) target = $region44
      $region43: #{tpu_custom_call.1} parent=5 // pred_region
        %s396 = ssub.s32 %s15, 2
        // Predicated region
        $region45: #{tpu_custom_call.1} parent=43 // pred_check
          %p397 = pneg %p91
        $region46: #{tpu_custom_call.1} parent=43 // pred_check_branch
          %399 = sbr.rel (%p397) target = $region48
        $region47: #{tpu_custom_call.1} parent=43 // pred_region
          %s400 = sand.u32 %s76, 1
          %s401 = scalar_lea.sflag [#allocation4], %s400
          %s402 = sand.u32 %s76, 1
          %s403 = smul.addr %s402, 16
          %s404 = scalar_lea.vmem [#allocation7], %s403
          %405 = dma.done %s401, 256
        $region48: #{tpu_custom_call.1} parent=43 // pred_fallthru
          _
      $region44: #{tpu_custom_call.1} parent=5 // pred_fallthru
        _
    $region6: #{tpu_custom_call.1} parent=1 // loop_footer
      %s19 = sadd.s32 1, %s15
    $region7: #{tpu_custom_call.1} parent=1 // loop_footer_branch
      %14 = sbr.rel target = $region3
    $region8: #{tpu_custom_call.1} parent=1 // loop_exit
      _
    %406 = vsyncpa [#allocation3], 1
    %s407 = scalar_lea.sflag [#allocation3], 1
    %408 = vsyncpa %s407, 1
    %409 = vsyncpa [#allocation6], 1
    %410 = vsyncpa [#allocation4], 1
    %s411 = scalar_lea.sflag [#allocation4], 1
    %412 = vsyncpa %s411, 1

</llo_original>
